<compile_context>
chip_gen: v7x
topology: tpu7x:2x2x1
jax: 0.10.0
libtpu: 0.0.40
codegen_flags: <defaults>
</compile_context>

<pallas_src>
import jax
import jax.numpy as jnp
from jax.experimental import pallas as pl
from jax.experimental.pallas import tpu as pltpu


def valuenet_kernel(x_ref, w1_ref, b1_ref, w2_ref, b2_ref, o_ref):
    # fc1 on the MXU, batch on lanes: [H, S] @ [S, TB] -> [H, TB], f32 accumulate.
    h = jnp.dot(w1_ref[...], x_ref[...], preferred_element_type=jnp.float32)
    # Bias ([H, 1] lane-broadcast) + ReLU on the VPU over lane-dense vregs.
    h = jnp.maximum(h + b1_ref[...], 0.0)
    # fc2 (hidden -> 1) as a tiny MXU matmul: [1, H] @ [H, TB] -> [1, TB].
    v = jnp.dot(w2_ref[...], h, preferred_element_type=jnp.float32)
    # Scalar bias from SMEM; output is already lane-dense -> straight store.
    o_ref[...] = (v + b2_ref[0]).astype(o_ref.dtype)


def _round_up(a, m):
    return ((a + m - 1) // m) * m


def value_net_forward_xt(x_t, w1, b1, w2, b2, *, max_tile=8192):
    """x_t: [S, B] (features on sublanes, batch on lanes).
    w1: [H, S] (torch layout); b1: [H, 1]; w2: [1, H]; b2: (1,). Returns [B, 1]."""
    S, B = x_t.shape
    H = w1.shape[0]

    # Batch tile on the lane axis: aim for <=2 balanced tiles (v7x has 2 TCs;
    # v5e/v6e just want few grid steps), 128-aligned, capped at max_tile.
    TB = min(max_tile, _round_up(pl.cdiv(B, 2), 128))
    n_tiles = pl.cdiv(B, TB)
    B_pad = n_tiles * TB          # output allocation only; x is never padded/copied

    out_row = pl.pallas_call(
        valuenet_kernel,
        out_shape=jax.ShapeDtypeStruct((1, B_pad), jnp.float32),
        grid=(n_tiles,),
        in_specs=[
            pl.BlockSpec((S, TB), lambda i: (0, i)),             # stream x^T tiles (ragged tail OK)
            pl.BlockSpec((H, S), lambda i: (0, 0)),              # weights stay VMEM-resident
            pl.BlockSpec((H, 1), lambda i: (0, 0)),              #   across the grid
            pl.BlockSpec((1, H), lambda i: (0, 0)),
            pl.BlockSpec(memory_space=pltpu.MemorySpace.SMEM),   # b2 scalar (1,) in SMEM
        ],
        out_specs=pl.BlockSpec((1, TB), lambda i: (0, i)),        # natively lane-dense output
        compiler_params=pltpu.CompilerParams(
            dimension_semantics=("parallel",),                    # v7x: shard batch over 2 TCs
        ),
        cost_estimate=pl.CostEstimate(
            flops=2 * B_pad * S * H + 4 * B_pad * H,
            transcendentals=0,
            bytes_accessed=4 * (B * S + H * S + 2 * H + 1 + B),
        ),
    )(x_t, w1, b1, w2, b2)

    # [1, B_pad] (batch on lanes) -> [B, 1]; padded lanes are discarded here.
    return out_row.reshape(B_pad, 1)[:B]


def value_net_forward(x, w1, b1, w2, b2, *, max_tile=8192):
    """x: [B, S] (torch layout). Transposes x once; store the rollout buffer
    pre-transposed and call value_net_forward_xt directly to skip this relayout."""
    return value_net_forward_xt(x.T, w1, b1, w2, b2, max_tile=max_tile)


def init_params(key, state_dim, hidden_dim):
    """Deterministic init mimicking torch.nn.Linear's U(-1/sqrt(fan_in), 1/sqrt(fan_in))."""
    k1, k2, k3, k4 = jax.random.split(key, 4)
    bound1 = 1.0 / jnp.sqrt(jnp.float32(state_dim))
    bound2 = 1.0 / jnp.sqrt(jnp.float32(hidden_dim))
    # fc1 kept in torch layout [H, S]; b1 stored as a column for lane-broadcast;
    # fc2 in torch layout [1, H]; b2 as a 1-D scalar for SMEM.
    w1 = jax.random.uniform(k1, (hidden_dim, state_dim), jnp.float32, -bound1, bound1)
    b1 = jax.random.uniform(k2, (hidden_dim, 1), jnp.float32, -bound1, bound1)
    w2 = jax.random.uniform(k3, (1, hidden_dim), jnp.float32, -bound2, bound2)
    b2 = jax.random.uniform(k4, (1,), jnp.float32, -bound2, bound2)
    return w1, b1, w2, b2


if __name__ == "__main__":
    state_dim, hidden_dim, batch = 16, 32, 8

    key = jax.random.PRNGKey(0)
    kx, kp, kx2 = jax.random.split(key, 3)
    x = jax.random.normal(kx, (batch, state_dim), dtype=jnp.float32)
    w1, b1, w2, b2 = init_params(kp, state_dim, hidden_dim)

    def ref_fn(xv):
        h = jnp.maximum(xv @ w1.T + b1[:, 0], 0.0)
        return h @ w2.T + b2

    # Small-batch (single ragged tile) path.
    out = jax.block_until_ready(value_net_forward(x, w1, b1, w2, b2))
    assert out.shape == (batch, 1)
    assert jnp.allclose(out, ref_fn(x), atol=1e-5, rtol=1e-5)

    # Gridded path: 1000 rows -> 2 balanced tiles of 512 (last one ragged), no padding copy.
    x_big = jax.random.normal(kx2, (1000, state_dim), dtype=jnp.float32)
    out_big = jax.block_until_ready(value_net_forward(x_big, w1, b1, w2, b2))
    assert out_big.shape == (1000, 1)
    assert jnp.allclose(out_big, ref_fn(x_big), atol=1e-5, rtol=1e-5)

    print("KERNEL_OK")
</pallas_src>

<mosaic_0001>
module attributes {stable_mosaic.version = 11 : i64} {
  func.func @valuenet_kernel(%arg0: i32, %arg1: memref<16x128xf32, #tpu.memory_space<vmem>>, %arg2: memref<32x16xf32, #tpu.memory_space<vmem>>, %arg3: memref<32x1xf32, #tpu.memory_space<vmem>>, %arg4: memref<1x32xf32, #tpu.memory_space<vmem>>, %arg5: memref<1xf32, #tpu.memory_space<smem>>, %arg6: memref<1x128xf32, #tpu.memory_space<vmem>>) attributes {dimension_semantics = [#tpu.dimension_semantics<parallel>], iteration_bounds = array<i64: 1>, scalar_prefetch = 0 : i64, scratch_operands = 0 : i64, tpu.core_type = #tpu.core_type<tc>, window_params = [{transform_indices = @transform_0, window_bounds = array<i64: 16, 128>}, {pipeline_mode = #tpu.pipeline_mode<synchronous>, transform_indices = @transform_1, window_bounds = array<i64: 32, 16>}, {pipeline_mode = #tpu.pipeline_mode<synchronous>, transform_indices = @transform_2, window_bounds = array<i64: 32, 1>}, {pipeline_mode = #tpu.pipeline_mode<synchronous>, transform_indices = @transform_3, window_bounds = array<i64: 1, 32>}, {transform_indices = @transform_4, window_bounds = array<i64: 1>}, {transform_indices = @transform_5, window_bounds = array<i64: 1, 128>}]} {
    %c0 = arith.constant 0 : index
    %c0_0 = arith.constant 0 : index
    %0 = vector.load %arg2[%c0, %c0_0] : memref<32x16xf32, #tpu.memory_space<vmem>>, vector<32x16xf32>
    %c0_1 = arith.constant 0 : index
    %c0_2 = arith.constant 0 : index
    %1 = vector.load %arg1[%c0_1, %c0_2] : memref<16x128xf32, #tpu.memory_space<vmem>>, vector<16x128xf32>
    %cst = arith.constant dense<0.000000e+00> : vector<32x128xf32>
    %2 = tpu.matmul %0, %1, %cst {dimension_numbers = #tpu.dot_dimension_numbers<[1], [0], [0], [1], [0, 0, 1, 1], [], []>} : vector<32x16xf32>, vector<16x128xf32>, vector<32x128xf32> -> vector<32x128xf32>
    %c0_3 = arith.constant 0 : index
    %c0_4 = arith.constant 0 : index
    %3 = vector.load %arg3[%c0_3, %c0_4] : memref<32x1xf32, #tpu.memory_space<vmem>>, vector<32x1xf32>
    %4 = vector.broadcast %3 : vector<32x1xf32> to vector<32x128xf32>
    %5 = arith.addf %2, %4 : vector<32x128xf32>
    %cst_5 = arith.constant 0.000000e+00 : f32
    %6 = vector.broadcast %cst_5 : f32 to vector<32x128xf32>
    %7 = arith.maximumf %5, %6 : vector<32x128xf32>
    %c0_6 = arith.constant 0 : index
    %c0_7 = arith.constant 0 : index
    %8 = vector.load %arg4[%c0_6, %c0_7] : memref<1x32xf32, #tpu.memory_space<vmem>>, vector<1x32xf32>
    %cst_8 = arith.constant dense<0.000000e+00> : vector<1x128xf32>
    %9 = tpu.matmul %8, %7, %cst_8 {dimension_numbers = #tpu.dot_dimension_numbers<[1], [0], [0], [1], [0, 0, 1, 1], [], []>} : vector<1x32xf32>, vector<32x128xf32>, vector<1x128xf32> -> vector<1x128xf32>
    %c0_9 = arith.constant 0 : index
    %10 = memref.load %arg5[%c0_9] : memref<1xf32, #tpu.memory_space<smem>>
    %11 = vector.broadcast %10 : f32 to vector<1x128xf32>
    %12 = arith.addf %9, %11 : vector<1x128xf32>
    %c0_10 = arith.constant 0 : index
    %c0_11 = arith.constant 0 : index
    %13 = vector.load %arg6[%c0_10, %c0_11] : memref<1x128xf32, #tpu.memory_space<vmem>>, vector<1x128xf32>
    tpu.vector_store %arg6[%c0_10, %c0_11], %12 {strides = array<i32>} : memref<1x128xf32, #tpu.memory_space<vmem>>, vector<1x128xf32>,
    return
  }
  func.func @transform_0(%arg0: i32) -> (i32, i32) {
    %c0_i32 = arith.constant 0 : i32
    %c0_i32_0 = arith.constant 0 : i32
    return %c0_i32, %arg0 : i32, i32
  }
  func.func @transform_1(%arg0: i32) -> (i32, i32) {
    %c0_i32 = arith.constant 0 : i32
    %c0_i32_0 = arith.constant 0 : i32
    %c0_i32_1 = arith.constant 0 : i32
    return %c0_i32, %c0_i32_0 : i32, i32
  }
  func.func @transform_2(%arg0: i32) -> (i32, i32) {
    %c0_i32 = arith.constant 0 : i32
    %c0_i32_0 = arith.constant 0 : i32
    %c0_i32_1 = arith.constant 0 : i32
    return %c0_i32, %c0_i32_0 : i32, i32
  }
  func.func @transform_3(%arg0: i32) -> (i32, i32) {
    %c0_i32 = arith.constant 0 : i32
    %c0_i32_0 = arith.constant 0 : i32
    %c0_i32_1 = arith.constant 0 : i32
    return %c0_i32, %c0_i32_0 : i32, i32
  }
  func.func @transform_4(%arg0: i32) -> i32 {
    %c0_i32 = arith.constant 0 : i32
    %c0_i32_0 = arith.constant 0 : i32
    return %c0_i32 : i32
  }
  func.func @transform_5(%arg0: i32) -> (i32, i32) {
    %c0_i32 = arith.constant 0 : i32
    %c0_i32_0 = arith.constant 0 : i32
    return %c0_i32, %arg0 : i32, i32
  }
}

</mosaic_0001>

<llo_original>
// kernel: tpu_custom_call.1
$region0: #{tpu_custom_call.1}
  #allocation0 [shape = 'u32[]', space=smem, size = 0x4, offset = 0x4, fixed_abs, tag = 'smem constant byte address 0x4 - core index']
  #allocation1 [shape = 'u32[144,128]{1,0:T(1,128)}', space=vmem, size = 0x12000, scoped, tag = 'internal scratch']
  #allocation2 [shape = 'f32[1]{0:T(128)S(6)}', space=smem, size = 0x200, scoped, tag = 'scoped memory for tpu_custom_call.1']
  %s0 = inlined_call_operand.vmem [shape: f32[16,8], index: 0, kind: input, shape index: {}]
  %s1 = inlined_call_operand.vmem [shape: f32[32,16], index: 1, kind: input, shape index: {}]
  %s2 = inlined_call_operand.vmem [shape: f32[32,1], index: 2, kind: input, shape index: {}]
  %s3 = inlined_call_operand.vmem [shape: f32[1,32], index: 3, kind: input, shape index: {}]
  %s4 = inlined_call_operand.<no memory space> [shape: f32[1], index: 4, kind: input, shape index: {}]
  %s5 = inlined_call_operand.hbm [shape: f32[1,128], index: 5, kind: output, shape index: {}]
  %s6 = sld [smem:[#allocation0]]
  $region30: #{tpu_custom_call.1} parent=0
    _
  %s8 = ssub.s32 1, %s6
  %s9 = scalar_select 0, %s8, %s6
  %10 = sst [smem:[#allocation2]] %s4
  $region1: #{tpu_custom_call.1} parent=0
    #allocation3 [shape = 'u8[512]{0}', space=vmem, size = 0x400, scoped, tag = 'output window, operand 0, single buffered']
    #allocation4 [shape = 's32[1]{0}', space=sflag, size = 0x4, scoped, tag = 'scoped memory for tpu_custom_call.1']
    %11 = vsyncpa [#allocation4], 0
    // Predicated region
    $region2: #{tpu_custom_call.1} parent=1 // pred_check
      _
    $region3: #{tpu_custom_call.1} parent=1 // pred_check_branch
      %13 = sbr.rel (0) target = $region5
    $region4: #{tpu_custom_call.1} parent=1 // pred_region
      _
    $region5: #{tpu_custom_call.1} parent=1 // pred_fallthru
      _
    // Predicated region
    $region6: #{tpu_custom_call.1} parent=1 // pred_check
      _
    $region7: #{tpu_custom_call.1} parent=1 // pred_check_branch
      %15 = sbr.rel (0) target = $region9
    $region8: #{tpu_custom_call.1} parent=1 // pred_region
      _
    $region9: #{tpu_custom_call.1} parent=1 // pred_fallthru
      _
    // Predicated region
    $region10: #{tpu_custom_call.1} parent=1 // pred_check
      _
    $region11: #{tpu_custom_call.1} parent=1 // pred_check_branch
      %17 = sbr.rel (0) target = $region13
    $region12: #{tpu_custom_call.1} parent=1 // pred_region
      _
    $region13: #{tpu_custom_call.1} parent=1 // pred_fallthru
      _
    // Predicated region
    $region14: #{tpu_custom_call.1} parent=1 // pred_check
      _
    $region15: #{tpu_custom_call.1} parent=1 // pred_check_branch
      %19 = sbr.rel (0) target = $region17
    $region16: #{tpu_custom_call.1} parent=1 // pred_region
      _
    $region17: #{tpu_custom_call.1} parent=1 // pred_fallthru
      _
    // Predicated region
    $region18: #{tpu_custom_call.1} parent=1 // pred_check
      _
    $region19: #{tpu_custom_call.1} parent=1 // pred_check_branch
      %21 = sbr.rel (0) target = $region21
    $region20: #{tpu_custom_call.1} parent=1 // pred_region
      _
    $region21: #{tpu_custom_call.1} parent=1 // pred_fallthru
      _
    %v22 = vld [vmem:[%s1] sm:$0xff]
    %v23 = vld [vmem:[%s1 + $0x8] sm:$0xff]
    %v24 = vld [vmem:[%s1 + $0x10] sm:$0xff]
    %v25 = vld [vmem:[%s1 + $0x18] sm:$0xff]
    %v26 = vld [vmem:[%s0] sm:$0xff]
    %v27 = vld [vmem:[%s0 + $0x8] sm:$0xff]
    %v28 = vld [vmem:[%s2] sm:$0xff]
    %v29 = vld [vmem:[%s2 + $0x8] sm:$0xff]
    %v30 = vld [vmem:[%s2 + $0x10] sm:$0xff]
    %v31 = vld [vmem:[%s2 + $0x18] sm:$0xff]
    %33 = vset.pattern.permute.xlu0 0
    %34 = vperm.xlu0 %33, %v28
    %v35 = vpop.permute.xlu0 %34
    %38 = vset.pattern.permute.xlu0 0
    %39 = vperm.xlu0 %38, %v29
    %v40 = vpop.permute.xlu0 %39
    %43 = vset.pattern.permute.xlu0 0
    %44 = vperm.xlu0 %43, %v30
    %v45 = vpop.permute.xlu0 %44
    %48 = vset.pattern.permute.xlu0 0
    %49 = vperm.xlu0 %48, %v31
    %v50 = vpop.permute.xlu0 %49
    %vm52 = vcmask 130048
    %v54 = vsel %vm52, %v22, 0
    %v57 = vsel %vm52, %v23, 0
    %v60 = vsel %vm52, %v24, 0
    %v63 = vsel %vm52, %v25, 0
    %65 = vmatprep.subr.mxu0 0.0
    %66 = vmatpush1.msra.mxu0 %v26
    %67 = vmatprep.subr.mxu0 0.0
    %68 = vmatpush1.msra.mxu0 %v27
    %69 = vmatprep.subr.mxu0 0.0
    %70 = vmatpush1.msra.mxu0 0.0
    %71 = vmatprep.subr.mxu0 0.0
    %72 = vmatpush1.msra.mxu0 0.0
    %73 = vmatprep.subr.mxu0 0.0
    %74 = vmatpush1.msra.mxu0 0.0
    %75 = vmatprep.subr.mxu0 0.0
    %76 = vmatpush1.msra.mxu0 0.0
    %77 = vmatprep.subr.mxu0 0.0
    %78 = vmatpush1.msra.mxu0 0.0
    %79 = vmatprep.subr.mxu0 0.0
    %80 = vmatpush1.msra.mxu0 0.0
    %81 = vmatprep.subr.mxu0 0.0
    %82 = vmatpush1.msra.mxu0 0.0
    %83 = vmatprep.subr.mxu0 0.0
    %84 = vmatpush1.msra.mxu0 0.0
    %85 = vmatprep.subr.mxu0 0.0
    %86 = vmatpush1.msra.mxu0 0.0
    %87 = vmatprep.subr.mxu0 0.0
    %88 = vmatpush1.msra.mxu0 0.0
    %89 = vmatprep.subr.mxu0 0.0
    %90 = vmatpush1.msra.mxu0 0.0
    %91 = vmatprep.subr.mxu0 0.0
    %92 = vmatpush1.msra.mxu0 0.0
    %93 = vmatprep.subr.mxu0 0.0
    %94 = vmatpush1.msra.mxu0 0.0
    %95 = vmatprep.subr.mxu0 0.0
    %96 = vmatpush1.msra.mxu0 0.0
    %97 = vmatprep.subr.mxu0 0.0
    %98 = vmatpush1.msra.mxu0 0.0
    %99 = vmatprep.subr.mxu0 0.0
    %100 = vmatpush1.msra.mxu0 0.0
    %101 = vmatprep.subr.mxu0 0.0
    %102 = vmatpush1.msra.mxu0 0.0
    %103 = vmatprep.subr.mxu0 0.0
    %104 = vmatpush1.msra.mxu0 0.0
    %105 = vmatprep.subr.mxu0 0.0
    %106 = vmatpush1.msra.mxu0 0.0
    %107 = vmatprep.subr.mxu0 0.0
    %108 = vmatpush1.msra.mxu0 0.0
    %109 = vmatprep.subr.mxu0 0.0
    %110 = vmatpush1.msra.mxu0 0.0
    %111 = vmatprep.subr.mxu0 0.0
    %112 = vmatpush1.msra.mxu0 0.0
    %113 = vmatprep.subr.mxu0 0.0
    %114 = vmatpush1.msra.mxu0 0.0
    %115 = vmatprep.subr.mxu0 0.0
    %116 = vmatpush1.msra.mxu0 0.0
    %117 = vmatprep.subr.mxu0 0.0
    %118 = vmatpush1.msra.mxu0 0.0
    %119 = vmatprep.subr.mxu0 0.0
    %120 = vmatpush1.msra.mxu0 0.0
    %121 = vmatprep.subr.mxu0 0.0
    %122 = vmatpush1.msra.mxu0 0.0
    %123 = vmatprep.subr.mxu0 0.0
    %124 = vmatpush1.msra.mxu0 0.0
    %125 = vmatprep.subr.mxu0 0.0
    %126 = vmatpush1.msra.mxu0 0.0
    %127 = vmatprep.subr.mxu0 0.0
    %128 = vmatpush1.msra.mxu0 0.0
    %129 = vmatprep.mubr.f32.mxu0 0.0
    %130 = vmatmul.mubr.f32.gmra.mrb[0].mxu0 %v54
    %v131 = vpop.f32.mrb[0].mxu0
    %v132 = vadd.f32 %v35, %v131
    %v133 = vpop.f32.mrb[0].mxu0
    %134 = vmatprep.mubr.f32.mxu0 0.0
    %135 = vmatmul.mubr.f32.gmra.mrb[0].mxu0 %v57
    %v136 = vpop.f32.mrb[0].mxu0
    %v137 = vadd.f32 %v40, %v136
    %v138 = vpop.f32.mrb[0].mxu0
    %139 = vmatprep.mubr.f32.mxu0 0.0
    %140 = vmatmul.mubr.f32.gmra.mrb[0].mxu0 %v60
    %v141 = vpop.f32.mrb[0].mxu0
    %v142 = vadd.f32 %v45, %v141
    %v143 = vpop.f32.mrb[0].mxu0
    %144 = vmatprep.mubr.f32.mxu0 0.0
    %145 = vmatmul.mubr.f32.gmra.mrb[0].mxu0 %v63
    %v146 = vpop.f32.mrb[0].mxu0
    %v147 = vadd.f32 %v50, %v146
    %v148 = vpop.f32.mrb[0].mxu0
    %149 = vdwg.mxu0
    %v150 = vmax.f32 %v132, 0.0
    %v151 = vmax.f32 %v137, 0.0
    %v152 = vmax.f32 %v142, 0.0
    %v153 = vmax.f32 %v147, 0.0
    %v154 = vld [vmem:[%s3] sm:$0x1]
    %s155 = sld [smem:[#allocation2]]
    %v156 = vstv %s155
    %vm157 = vcmask 261120
    %v159 = vsel %vm157, %v154, 0
    %161 = vmatprep.subr.mxu0 0.0
    %162 = vmatpush1.msra.mxu0 %v150
    %163 = vmatprep.subr.mxu0 0.0
    %164 = vmatpush1.msra.mxu0 %v151
    %165 = vmatprep.subr.mxu0 0.0
    %166 = vmatpush1.msra.mxu0 %v152
    %167 = vmatprep.subr.mxu0 0.0
    %168 = vmatpush1.msra.mxu0 %v153
    %169 = vmatprep.subr.mxu0 0.0
    %170 = vmatpush1.msra.mxu0 0.0
    %171 = vmatprep.subr.mxu0 0.0
    %172 = vmatpush1.msra.mxu0 0.0
    %173 = vmatprep.subr.mxu0 0.0
    %174 = vmatpush1.msra.mxu0 0.0
    %175 = vmatprep.subr.mxu0 0.0
    %176 = vmatpush1.msra.mxu0 0.0
    %177 = vmatprep.subr.mxu0 0.0
    %178 = vmatpush1.msra.mxu0 0.0
    %179 = vmatprep.subr.mxu0 0.0
    %180 = vmatpush1.msra.mxu0 0.0
    %181 = vmatprep.subr.mxu0 0.0
    %182 = vmatpush1.msra.mxu0 0.0
    %183 = vmatprep.subr.mxu0 0.0
    %184 = vmatpush1.msra.mxu0 0.0
    %185 = vmatprep.subr.mxu0 0.0
    %186 = vmatpush1.msra.mxu0 0.0
    %187 = vmatprep.subr.mxu0 0.0
    %188 = vmatpush1.msra.mxu0 0.0
    %189 = vmatprep.subr.mxu0 0.0
    %190 = vmatpush1.msra.mxu0 0.0
    %191 = vmatprep.subr.mxu0 0.0
    %192 = vmatpush1.msra.mxu0 0.0
    %193 = vmatprep.subr.mxu0 0.0
    %194 = vmatpush1.msra.mxu0 0.0
    %195 = vmatprep.subr.mxu0 0.0
    %196 = vmatpush1.msra.mxu0 0.0
    %197 = vmatprep.subr.mxu0 0.0
    %198 = vmatpush1.msra.mxu0 0.0
    %199 = vmatprep.subr.mxu0 0.0
    %200 = vmatpush1.msra.mxu0 0.0
    %201 = vmatprep.subr.mxu0 0.0
    %202 = vmatpush1.msra.mxu0 0.0
    %203 = vmatprep.subr.mxu0 0.0
    %204 = vmatpush1.msra.mxu0 0.0
    %205 = vmatprep.subr.mxu0 0.0
    %206 = vmatpush1.msra.mxu0 0.0
    %207 = vmatprep.subr.mxu0 0.0
    %208 = vmatpush1.msra.mxu0 0.0
    %209 = vmatprep.subr.mxu0 0.0
    %210 = vmatpush1.msra.mxu0 0.0
    %211 = vmatprep.subr.mxu0 0.0
    %212 = vmatpush1.msra.mxu0 0.0
    %213 = vmatprep.subr.mxu0 0.0
    %214 = vmatpush1.msra.mxu0 0.0
    %215 = vmatprep.subr.mxu0 0.0
    %216 = vmatpush1.msra.mxu0 0.0
    %217 = vmatprep.subr.mxu0 0.0
    %218 = vmatpush1.msra.mxu0 0.0
    %219 = vmatprep.subr.mxu0 0.0
    %220 = vmatpush1.msra.mxu0 0.0
    %221 = vmatprep.subr.mxu0 0.0
    %222 = vmatpush1.msra.mxu0 0.0
    %223 = vmatprep.subr.mxu0 0.0
    %224 = vmatpush1.msra.mxu0 0.0
    %225 = vmatprep.mubr.f32.mxu0 0.0
    %226 = vmatmul.mubr.f32.gmra.mrb[0].mxu0 %v159
    %v227 = vpop.f32.mrb[0].mxu0
    %v228 = vadd.f32 %v156, %v227
    %v229 = vpop.f32.mrb[0].mxu0
    %230 = vdwg.mxu0
    %231 = vst [vmem:[#allocation3] sm:$0x1] %v228
    // Predicated region
    $region22: #{tpu_custom_call.1} parent=1 // pred_check
      _
    $region23: #{tpu_custom_call.1} parent=1 // pred_check_branch
      %233 = sbr.rel (0) target = $region25
    $region24: #{tpu_custom_call.1} parent=1 // pred_region
      %s235 = ssub.s32 16, 16
      %236 = vsyncadd [#allocation4], %s235
      %s238 = sshll.u32 [#allocation3], 4
      %s239 = int_to_ptr.vmem [resolvable:$true] %s238
      %241 = dma.vmem_to_hbm [thread:$0]  %s239, 16, %s5, [#allocation4]
    $region25: #{tpu_custom_call.1} parent=1 // pred_fallthru
      _
    // Predicated region
    $region26: #{tpu_custom_call.1} parent=1 // pred_check
      _
    $region27: #{tpu_custom_call.1} parent=1 // pred_check_branch
      %243 = sbr.rel (0) target = $region29
    $region28: #{tpu_custom_call.1} parent=1 // pred_region
      %244 = dma.done [#allocation4], 16
    $region29: #{tpu_custom_call.1} parent=1 // pred_fallthru
      _
    %245 = vsyncpa [#allocation4], 1

</llo_original>
